<compile_context>
chip_gen: v6e
topology: v6e:2x2x1
jax: 0.10.0
libtpu: 0.0.40
codegen_flags: <defaults>
</compile_context>

<pallas_src>
import functools

import jax
import jax.numpy as jnp
from jax.experimental import pallas as pl
from jax.experimental.pallas import tpu as pltpu


def _make_dice_kernel(C, T, HW):
    """Kernel over blocks: logits (1, C, T), labels (1, 1, T)."""
    needs_mask = (HW % T) != 0  # static: skip tail masking when T divides HW

    def kernel(logits_ref, labels_ref, inter_ref, psum_ref, tsum_ref,
               acc_i, acc_p, acc_t):
        t = pl.program_id(1)

        @pl.when(t == 0)
        def _():
            acc_i[...] = jnp.zeros_like(acc_i)
            acc_p[...] = jnp.zeros_like(acc_p)
            acc_t[...] = jnp.zeros_like(acc_t)

        x = logits_ref[0].astype(jnp.float32)            # (C, T) classes on sublanes
        # softmax over the class (sublane) axis == log_softmax(dim=1).exp()
        m = jnp.max(x, axis=0, keepdims=True)            # (1, T)
        e = jnp.exp(x - m)                               # (C, T)
        denom = jnp.sum(e, axis=0, keepdims=True)        # (1, T)
        p = e * pl.reciprocal(denom, approx=True)        # (C, T)

        lbl = labels_ref[0]                              # (1, T) int32, lane-dense
        cls = jax.lax.broadcasted_iota(jnp.int32, (C, T), 0)
        onehot = lbl == cls                              # (C, T) bool

        if needs_mask:
            tok = t * T + jax.lax.broadcasted_iota(jnp.int32, (1, T), 1)
            valid = tok < HW                             # (1, T)
            onehot = jnp.logical_and(onehot, valid)
            p = jnp.where(valid, p, 0.0)                 # select kills padded garbage

        # Per-class partial sums over the token (lane) axis for this tile.
        acc_i[...] += jnp.sum(jnp.where(onehot, p, 0.0), axis=1, keepdims=True)
        acc_p[...] += jnp.sum(p, axis=1, keepdims=True)
        acc_t[...] += jnp.sum(onehot.astype(jnp.float32), axis=1, keepdims=True)

        @pl.when(t == pl.num_programs(1) - 1)
        def _():
            inter_ref[0] = acc_i[...]
            psum_ref[0] = acc_p[...]
            tsum_ref[0] = acc_t[...]

    return kernel


def _dice_sums(logits, labels, *, T):
    """logits: (B, C, HW), labels: (B, 1, HW) int32 -> three (B, C, 1) f32 sums."""
    B, C, HW = logits.shape
    NT = pl.cdiv(HW, T)
    kernel = _make_dice_kernel(C, T, HW)

    out_shape = [jax.ShapeDtypeStruct((B, C, 1), jnp.float32)] * 3
    out_spec = pl.BlockSpec((1, C, 1), lambda b, t: (b, 0, 0))

    return pl.pallas_call(
        kernel,
        out_shape=out_shape,
        grid_spec=pltpu.PrefetchScalarGridSpec(
            num_scalar_prefetch=0,
            grid=(B, NT),
            in_specs=[
                pl.BlockSpec((1, C, T), lambda b, t: (b, 0, t)),   # NCHW view, no copy
                pl.BlockSpec((1, 1, T), lambda b, t: (b, 0, t)),   # lane-dense labels
            ],
            out_specs=[out_spec, out_spec, out_spec],
            scratch_shapes=[pltpu.VMEM((C, 1), jnp.float32)] * 3,
        ),
        compiler_params=pltpu.CompilerParams(
            # batch axis "parallel": each core owns its own (b, :, :) accumulator
            # rows -> both v7x TensorCores run whenever B >= 2.
            dimension_semantics=("parallel", "arbitrary"),
        ),
    )(logits, labels)


@functools.partial(jax.jit, static_argnames=("smooth", "eps"))
def dice_loss_multiclass(output, target, smooth=1.0, eps=1e-7):
    """Pallas implementation of DiceLoss.forward (MULTICLASS_MODE, ignore_index=None).

    output: (B, C, H, W) float logits
    target: (B, H, W) integer class labels
    """
    B, C, H, W = output.shape
    HW = H * W

    logits = output.reshape(B, C, HW)          # pure view of NCHW — no transpose pass
    labels = target.reshape(B, 1, HW)
    if labels.dtype != jnp.int32:
        labels = labels.astype(jnp.int32)

    # Token tile: multiple of 128, >= 2048, aiming for ~512 KiB of logits per block.
    t_budget = max(2048, (512 * 1024) // (4 * C))
    t_budget = (t_budget // 128) * 128
    T = min(t_budget, ((HW + 127) // 128) * 128)

    inter_b, psum_b, tsum_b = _dice_sums(logits, labels, T=T)
    inter = jnp.sum(inter_b[:, :, 0], axis=0)  # (C,)
    psum = jnp.sum(psum_b[:, :, 0], axis=0)    # (C,)
    tsum = jnp.sum(tsum_b[:, :, 0], axis=0)    # (C,)

    # Epilogue (tiny, per-class): cardinality via sum(p+t) = sum(p)+sum(t).
    card = psum + tsum
    scores = (2.0 * inter + smooth) / jnp.maximum(card + smooth, eps)
    loss = (1.0 - scores) * (tsum > 0).astype(jnp.float32)
    return jnp.mean(loss)


if __name__ == "__main__":
    key = jax.random.PRNGKey(0)
    k1, k2 = jax.random.split(key)

    B, C, H, W = 2, 4, 16, 16
    logits = jax.random.normal(k1, (B, C, H, W), dtype=jnp.float32)
    target = jax.random.randint(k2, (B, H, W), 0, C, dtype=jnp.int32)

    loss = dice_loss_multiclass(logits, target, smooth=1.0, eps=1e-7)
    jax.block_until_ready(loss)

    # Pure-JAX reference check (same math as the PyTorch module).
    p = jax.nn.softmax(logits, axis=1).reshape(B, C, -1)
    t = jax.nn.one_hot(target.reshape(B, -1), C).transpose(0, 2, 1)
    inter = jnp.sum(p * t, axis=(0, 2))
    card = jnp.sum(p + t, axis=(0, 2))
    scores = (2.0 * inter + 1.0) / jnp.maximum(card + 1.0, 1e-7)
    ref = jnp.mean((1.0 - scores) * (jnp.sum(t, axis=(0, 2)) > 0))
    # Kernel uses pl.reciprocal(approx=True) in the softmax -> slightly looser tol.
    assert jnp.allclose(loss, ref, atol=1e-3, rtol=1e-3), (loss, ref)

    print("KERNEL_OK")
</pallas_src>

<mosaic_0001>
module attributes {stable_mosaic.version = 11 : i64} {
  func.func @kernel(%arg0: i32, %arg1: i32, %arg2: memref<1x4x256xf32, #tpu.memory_space<vmem>>, %arg3: memref<1x1x256xi32, #tpu.memory_space<vmem>>, %arg4: memref<1x4x1xf32, #tpu.memory_space<vmem>>, %arg5: memref<1x4x1xf32, #tpu.memory_space<vmem>>, %arg6: memref<1x4x1xf32, #tpu.memory_space<vmem>>, %arg7: memref<4x1xf32, #tpu.memory_space<vmem>>, %arg8: memref<4x1xf32, #tpu.memory_space<vmem>>, %arg9: memref<4x1xf32, #tpu.memory_space<vmem>>) attributes {dimension_semantics = [#tpu.dimension_semantics<parallel>, #tpu.dimension_semantics<arbitrary>], iteration_bounds = array<i64: 2, 1>, scalar_prefetch = 0 : i64, scratch_operands = 3 : i64, tpu.core_type = #tpu.core_type<tc>, window_params = [{transform_indices = @transform_0, window_bounds = array<i64: 1, 4, 256>}, {transform_indices = @transform_1, window_bounds = array<i64: 1, 1, 256>}, {transform_indices = @transform_2, window_bounds = array<i64: 1, 4, 1>}, {transform_indices = @transform_3, window_bounds = array<i64: 1, 4, 1>}, {transform_indices = @transform_4, window_bounds = array<i64: 1, 4, 1>}]} {
    %c0_i32 = arith.constant 0 : i32
    %0 = arith.cmpi eq, %arg1, %c0_i32 : i32
    %1 = arith.extui %0 : i1 to i32
    %c0_i32_0 = arith.constant 0 : i32
    %2 = arith.cmpi ne, %1, %c0_i32_0 : i32
    scf.if %2 {
      %cst_25 = arith.constant 0.000000e+00 : f32
      %42 = vector.broadcast %cst_25 : f32 to vector<4x1xf32>
      %c0_26 = arith.constant 0 : index
      %c0_27 = arith.constant 0 : index
      %43 = vector.load %arg7[%c0_26, %c0_27] : memref<4x1xf32, #tpu.memory_space<vmem>>, vector<4x1xf32>
      tpu.vector_store %arg7[%c0_26, %c0_27], %42 {strides = array<i32>} : memref<4x1xf32, #tpu.memory_space<vmem>>, vector<4x1xf32>,
      %cst_28 = arith.constant 0.000000e+00 : f32
      %44 = vector.broadcast %cst_28 : f32 to vector<4x1xf32>
      %c0_29 = arith.constant 0 : index
      %c0_30 = arith.constant 0 : index
      %45 = vector.load %arg8[%c0_29, %c0_30] : memref<4x1xf32, #tpu.memory_space<vmem>>, vector<4x1xf32>
      tpu.vector_store %arg8[%c0_29, %c0_30], %44 {strides = array<i32>} : memref<4x1xf32, #tpu.memory_space<vmem>>, vector<4x1xf32>,
      %cst_31 = arith.constant 0.000000e+00 : f32
      %46 = vector.broadcast %cst_31 : f32 to vector<4x1xf32>
      %c0_32 = arith.constant 0 : index
      %c0_33 = arith.constant 0 : index
      %47 = vector.load %arg9[%c0_32, %c0_33] : memref<4x1xf32, #tpu.memory_space<vmem>>, vector<4x1xf32>
      tpu.vector_store %arg9[%c0_32, %c0_33], %46 {strides = array<i32>} : memref<4x1xf32, #tpu.memory_space<vmem>>, vector<4x1xf32>,
    } else {
    }
    %c0 = arith.constant 0 : index
    %c0_1 = arith.constant 0 : index
    %c0_2 = arith.constant 0 : index
    %3 = vector.load %arg2[%c0, %c0_1, %c0_2] : memref<1x4x256xf32, #tpu.memory_space<vmem>>, vector<1x4x256xf32>
    %4 = vector.shape_cast %3 : vector<1x4x256xf32> to vector<4x256xf32>
    %cst = arith.constant dense<0xFF800000> : vector<256xf32>
    %5 = vector.multi_reduction <maximumf>, %4, %cst [0] : vector<4x256xf32> to vector<256xf32>
    %6 = vector.shape_cast %5 : vector<256xf32> to vector<1x256xf32>
    %7 = vector.broadcast %6 : vector<1x256xf32> to vector<4x256xf32>
    %8 = arith.subf %4, %7 : vector<4x256xf32>
    %9 = math.exp %8 : vector<4x256xf32>
    %cst_3 = arith.constant dense<0.000000e+00> : vector<256xf32>
    %10 = vector.multi_reduction <add>, %9, %cst_3 [0] : vector<4x256xf32> to vector<256xf32>
    %11 = vector.shape_cast %10 : vector<256xf32> to vector<1x256xf32>
    %12 = tpu.reciprocal %11 {approx = true} : vector<1x256xf32> -> vector<1x256xf32>
    %13 = vector.broadcast %12 : vector<1x256xf32> to vector<4x256xf32>
    %14 = arith.mulf %9, %13 : vector<4x256xf32>
    %c0_4 = arith.constant 0 : index
    %c0_5 = arith.constant 0 : index
    %c0_6 = arith.constant 0 : index
    %15 = vector.load %arg3[%c0_4, %c0_5, %c0_6] : memref<1x1x256xi32, #tpu.memory_space<vmem>>, vector<1x1x256xi32>
    %16 = vector.shape_cast %15 : vector<1x1x256xi32> to vector<1x256xi32>
    %17 = tpu.iota {dimensions = array<i32: 0>} : vector<4x256xi32>
    %18 = vector.broadcast %16 : vector<1x256xi32> to vector<4x256xi32>
    %19 = arith.cmpi eq, %18, %17 : vector<4x256xi32>
    %c0_7 = arith.constant 0 : index
    %c0_8 = arith.constant 0 : index
    %20 = vector.load %arg7[%c0_7, %c0_8] : memref<4x1xf32, #tpu.memory_space<vmem>>, vector<4x1xf32>
    %cst_9 = arith.constant 0.000000e+00 : f32
    %21 = vector.broadcast %cst_9 : f32 to vector<4x256xf32>
    %22 = arith.select %19, %14, %21 : vector<4x256xi1>, vector<4x256xf32>
    %cst_10 = arith.constant dense<0.000000e+00> : vector<4xf32>
    %23 = vector.multi_reduction <add>, %22, %cst_10 [1] : vector<4x256xf32> to vector<4xf32>
    %24 = vector.shape_cast %23 : vector<4xf32> to vector<4x1xf32>
    %25 = arith.addf %20, %24 : vector<4x1xf32>
    %c0_11 = arith.constant 0 : index
    %c0_12 = arith.constant 0 : index
    %26 = vector.load %arg7[%c0_11, %c0_12] : memref<4x1xf32, #tpu.memory_space<vmem>>, vector<4x1xf32>
    tpu.vector_store %arg7[%c0_11, %c0_12], %25 {strides = array<i32>} : memref<4x1xf32, #tpu.memory_space<vmem>>, vector<4x1xf32>,
    %c0_13 = arith.constant 0 : index
    %c0_14 = arith.constant 0 : index
    %27 = vector.load %arg8[%c0_13, %c0_14] : memref<4x1xf32, #tpu.memory_space<vmem>>, vector<4x1xf32>
    %cst_15 = arith.constant dense<0.000000e+00> : vector<4xf32>
    %28 = vector.multi_reduction <add>, %14, %cst_15 [1] : vector<4x256xf32> to vector<4xf32>
    %29 = vector.shape_cast %28 : vector<4xf32> to vector<4x1xf32>
    %30 = arith.addf %27, %29 : vector<4x1xf32>
    %c0_16 = arith.constant 0 : index
    %c0_17 = arith.constant 0 : index
    %31 = vector.load %arg8[%c0_16, %c0_17] : memref<4x1xf32, #tpu.memory_space<vmem>>, vector<4x1xf32>
    tpu.vector_store %arg8[%c0_16, %c0_17], %30 {strides = array<i32>} : memref<4x1xf32, #tpu.memory_space<vmem>>, vector<4x1xf32>,
    %c0_18 = arith.constant 0 : index
    %c0_19 = arith.constant 0 : index
    %32 = vector.load %arg9[%c0_18, %c0_19] : memref<4x1xf32, #tpu.memory_space<vmem>>, vector<4x1xf32>
    %33 = arith.extui %19 : vector<4x256xi1> to vector<4x256xi32>
    %34 = arith.sitofp %33 : vector<4x256xi32> to vector<4x256xf32>
    %cst_20 = arith.constant dense<0.000000e+00> : vector<4xf32>
    %35 = vector.multi_reduction <add>, %34, %cst_20 [1] : vector<4x256xf32> to vector<4xf32>
    %36 = vector.shape_cast %35 : vector<4xf32> to vector<4x1xf32>
    %37 = arith.addf %32, %36 : vector<4x1xf32>
    %c0_21 = arith.constant 0 : index
    %c0_22 = arith.constant 0 : index
    %38 = vector.load %arg9[%c0_21, %c0_22] : memref<4x1xf32, #tpu.memory_space<vmem>>, vector<4x1xf32>
    tpu.vector_store %arg9[%c0_21, %c0_22], %37 {strides = array<i32>} : memref<4x1xf32, #tpu.memory_space<vmem>>, vector<4x1xf32>,
    %c0_i32_23 = arith.constant 0 : i32
    %39 = arith.cmpi eq, %arg1, %c0_i32_23 : i32
    %40 = arith.extui %39 : i1 to i32
    %c0_i32_24 = arith.constant 0 : i32
    %41 = arith.cmpi ne, %40, %c0_i32_24 : i32
    scf.if %41 {
      %c0_25 = arith.constant 0 : index
      %c0_26 = arith.constant 0 : index
      %42 = vector.load %arg7[%c0_25, %c0_26] : memref<4x1xf32, #tpu.memory_space<vmem>>, vector<4x1xf32>
      %c0_27 = arith.constant 0 : index
      %c0_28 = arith.constant 0 : index
      %c0_29 = arith.constant 0 : index
      %43 = vector.load %arg4[%c0_27, %c0_28, %c0_29] : memref<1x4x1xf32, #tpu.memory_space<vmem>>, vector<1x4x1xf32>
      %44 = vector.shape_cast %43 : vector<1x4x1xf32> to vector<4x1xf32>
      %45 = vector.shape_cast %42 : vector<4x1xf32> to vector<1x4x1xf32>
      tpu.vector_store %arg4[%c0_27, %c0_28, %c0_29], %45 {strides = array<i32>} : memref<1x4x1xf32, #tpu.memory_space<vmem>>, vector<1x4x1xf32>,
      %c0_30 = arith.constant 0 : index
      %c0_31 = arith.constant 0 : index
      %46 = vector.load %arg8[%c0_30, %c0_31] : memref<4x1xf32, #tpu.memory_space<vmem>>, vector<4x1xf32>
      %c0_32 = arith.constant 0 : index
      %c0_33 = arith.constant 0 : index
      %c0_34 = arith.constant 0 : index
      %47 = vector.load %arg5[%c0_32, %c0_33, %c0_34] : memref<1x4x1xf32, #tpu.memory_space<vmem>>, vector<1x4x1xf32>
      %48 = vector.shape_cast %47 : vector<1x4x1xf32> to vector<4x1xf32>
      %49 = vector.shape_cast %46 : vector<4x1xf32> to vector<1x4x1xf32>
      tpu.vector_store %arg5[%c0_32, %c0_33, %c0_34], %49 {strides = array<i32>} : memref<1x4x1xf32, #tpu.memory_space<vmem>>, vector<1x4x1xf32>,
      %c0_35 = arith.constant 0 : index
      %c0_36 = arith.constant 0 : index
      %50 = vector.load %arg9[%c0_35, %c0_36] : memref<4x1xf32, #tpu.memory_space<vmem>>, vector<4x1xf32>
      %c0_37 = arith.constant 0 : index
      %c0_38 = arith.constant 0 : index
      %c0_39 = arith.constant 0 : index
      %51 = vector.load %arg6[%c0_37, %c0_38, %c0_39] : memref<1x4x1xf32, #tpu.memory_space<vmem>>, vector<1x4x1xf32>
      %52 = vector.shape_cast %51 : vector<1x4x1xf32> to vector<4x1xf32>
      %53 = vector.shape_cast %50 : vector<4x1xf32> to vector<1x4x1xf32>
      tpu.vector_store %arg6[%c0_37, %c0_38, %c0_39], %53 {strides = array<i32>} : memref<1x4x1xf32, #tpu.memory_space<vmem>>, vector<1x4x1xf32>,
    } else {
    }
    return
  }
  func.func @transform_0(%arg0: i32, %arg1: i32) -> (i32, i32, i32) {
    %c0_i32 = arith.constant 0 : i32
    %c0_i32_0 = arith.constant 0 : i32
    return %arg0, %c0_i32, %arg1 : i32, i32, i32
  }
  func.func @transform_1(%arg0: i32, %arg1: i32) -> (i32, i32, i32) {
    %c0_i32 = arith.constant 0 : i32
    %c0_i32_0 = arith.constant 0 : i32
    return %arg0, %c0_i32, %arg1 : i32, i32, i32
  }
  func.func @transform_2(%arg0: i32, %arg1: i32) -> (i32, i32, i32) {
    %c0_i32 = arith.constant 0 : i32
    %c0_i32_0 = arith.constant 0 : i32
    %c0_i32_1 = arith.constant 0 : i32
    return %arg0, %c0_i32, %c0_i32_0 : i32, i32, i32
  }
  func.func @transform_3(%arg0: i32, %arg1: i32) -> (i32, i32, i32) {
    %c0_i32 = arith.constant 0 : i32
    %c0_i32_0 = arith.constant 0 : i32
    %c0_i32_1 = arith.constant 0 : i32
    return %arg0, %c0_i32, %c0_i32_0 : i32, i32, i32
  }
  func.func @transform_4(%arg0: i32, %arg1: i32) -> (i32, i32, i32) {
    %c0_i32 = arith.constant 0 : i32
    %c0_i32_0 = arith.constant 0 : i32
    %c0_i32_1 = arith.constant 0 : i32
    return %arg0, %c0_i32, %c0_i32_0 : i32, i32, i32
  }
}

</mosaic_0001>

<llo_original>
// kernel: dice_loss_multiclass.1
$region0: #{dice_loss_multiclass.1}
  #allocation0 [shape = 'u32[]', space=smem, size = 0x4, offset = 0x4, fixed_abs, tag = 'smem constant byte address 0x4 - core index']
  #allocation1 [shape = 'u32[144,128]{1,0:T(1,128)}', space=vmem, size = 0x12000, scoped, tag = 'internal scratch']
  #allocation2 [shape = 'f32[4,1]{1,0:T(4,128)}', space=vmem, size = 0x800, scoped, tag = 'scratch operand']
  #allocation3 [shape = 'f32[4,1]{1,0:T(4,128)}', space=vmem, size = 0x800, scoped, tag = 'scratch operand']
  #allocation4 [shape = 'f32[4,1]{1,0:T(4,128)}', space=vmem, size = 0x800, scoped, tag = 'scratch operand']
  %s0 = inlined_call_operand.vmem [shape: f32[2,4,256], index: 0, kind: input, shape index: {}]
  %s1 = inlined_call_operand.vmem [shape: s32[2,1,256], index: 1, kind: input, shape index: {}]
  %s2 = inlined_call_operand.vmem [shape: f32[2,4,1], index: 2, kind: output, shape index: {0}]
  %s3 = inlined_call_operand.vmem [shape: f32[2,4,1], index: 3, kind: output, shape index: {1}]
  %s4 = inlined_call_operand.vmem [shape: f32[2,4,1], index: 4, kind: output, shape index: {2}]
  %5 = xla_tuple %s2, %s3, %s4
  %s6 = sld [smem:[#allocation0]]
  $region65: #{dice_loss_multiclass.1} parent=0
    _
  %s8 = ssub.s32 1, %s6
  %s9 = scalar_select 0, %s8, %s6
  loop: start=0, step=1, limit=4
  $region2: #{dice_loss_multiclass.1} parent=0 // loop_pre_header
    _
  $region3: #{dice_loss_multiclass.1} parent=0 // loop_header
    %s11 = sphi 0, %s15
    %p12 = scmp.ge.s32.totalorder %s11, 4
    %s18 = sphi 0, %s30
    %s19 = sphi 0, %s26
    %s20 = sphi 0, %s18
    %s21 = sphi 0, %s19
    %s22 = sphi 0, %s20
    %s23 = sphi 0, %s21
    %s35 = sphi 0, %s37
    %s38 = sphi 0, %s35
    %s39 = sphi 0, %s38
    %s55 = sphi 0, %s39
    %s63 = sphi 0, %s65
    %s66 = sphi 0, %s63
    %s67 = sphi 0, %s66
    %s83 = sphi 0, %s67
    %s89 = sphi 0, %s91
    %s92 = sphi 0, %s89
    %s93 = sphi 0, %s92
    %s109 = sphi 0, %s93
    %s115 = sphi 0, %s117
    %s118 = sphi 0, %s115
    %s119 = sphi 0, %s118
    %s135 = sphi 0, %s119
    %s141 = sphi 0, %s143
    %s144 = sphi 0, %s141
    %s145 = sphi 0, %s144
    %s161 = sphi 0, %s145
  $region4: #{dice_loss_multiclass.1} parent=0 // loop_header_branch
    %14 = sbr.rel (%p12) target = $region8
  $region5: #{dice_loss_multiclass.1} parent=0 // loop_body
    %s16 = ssub.s32 %s11, 1
    %s17 = ssub.s32 %s11, 2
    %s24 = sadd.s32 1, %s19
    %p25 = scmp.ge.s32.totalorder %s24, 1
    %s26 = scalar_select %p25, 0, %s24
    %s27 = sadd.s32 1, %s18
    %s28 = scalar_select %p25, %s27, %s18
    %p29 = scmp.ge.s32.totalorder %s28, 2
    %s30 = scalar_select %p29, 0, %s28
    %s31 = ssub.s32 %s18, %s30
    %s32 = ssub.s32 %s19, %s26
    %s33 = sor.u32 %s31, %s32
    %p34 = scmp.eq.s32.totalorder %s33, 0
    %s36 = sadd.s32 %s35, 1
    %s37 = scalar_select %p34, %s35, %s36
    %p40 = pneg %p34
    %p41 = scmp.eq.s32.totalorder %s11, 1
    %p42 = por %p40, %p41
    %p43 = scmp.ne.s32.totalorder %s35, %s38
    %p44 = scmp.eq.s32.totalorder %s11, 0
    %p45 = por %p43, %p44
    %p46 = scmp.ne.s32.totalorder %s35, %s38
    %p47 = scmp.eq.s32.totalorder %s16, 1
    %p48 = por %p46, %p47
    %p49 = scmp.ne.s32.totalorder %s38, %s39
    %p50 = scmp.eq.s32.totalorder %s16, 0
    %p51 = por %p49, %p50
    %p52 = scmp.ne.s32.totalorder %s38, %s39
    %p53 = scmp.eq.s32.totalorder %s17, 1
    %p54 = por %p52, %p53
    %p56 = scmp.ne.s32.totalorder %s39, %s55
    %p57 = scmp.eq.s32.totalorder %s17, 0
    %p58 = por %p56, %p57
    %s59 = ssub.s32 %s18, %s30
    %s60 = ssub.s32 %s19, %s26
    %s61 = sor.u32 %s59, %s60
    %p62 = scmp.eq.s32.totalorder %s61, 0
    %s64 = sadd.s32 %s63, 1
    %s65 = scalar_select %p62, %s63, %s64
    %p68 = pneg %p62
    %p69 = scmp.eq.s32.totalorder %s11, 1
    %p70 = por %p68, %p69
    %p71 = scmp.ne.s32.totalorder %s63, %s66
    %p72 = scmp.eq.s32.totalorder %s11, 0
    %p73 = por %p71, %p72
    %p74 = scmp.ne.s32.totalorder %s63, %s66
    %p75 = scmp.eq.s32.totalorder %s16, 1
    %p76 = por %p74, %p75
    %p77 = scmp.ne.s32.totalorder %s66, %s67
    %p78 = scmp.eq.s32.totalorder %s16, 0
    %p79 = por %p77, %p78
    %p80 = scmp.ne.s32.totalorder %s66, %s67
    %p81 = scmp.eq.s32.totalorder %s17, 1
    %p82 = por %p80, %p81
    %p84 = scmp.ne.s32.totalorder %s67, %s83
    %p85 = scmp.eq.s32.totalorder %s17, 0
    %p86 = por %p84, %p85
    %s87 = ssub.s32 %s18, %s30
    %p88 = scmp.eq.s32.totalorder %s87, 0
    %s90 = sadd.s32 %s89, 1
    %s91 = scalar_select %p88, %s89, %s90
    %p94 = pneg %p88
    %p95 = scmp.eq.s32.totalorder %s11, 1
    %p96 = por %p94, %p95
    %p97 = scmp.ne.s32.totalorder %s89, %s92
    %p98 = scmp.eq.s32.totalorder %s11, 0
    %p99 = por %p97, %p98
    %p100 = scmp.ne.s32.totalorder %s89, %s92
    %p101 = scmp.eq.s32.totalorder %s16, 1
    %p102 = por %p100, %p101
    %p103 = scmp.ne.s32.totalorder %s92, %s93
    %p104 = scmp.eq.s32.totalorder %s16, 0
    %p105 = por %p103, %p104
    %p106 = scmp.ne.s32.totalorder %s92, %s93
    %p107 = scmp.eq.s32.totalorder %s17, 1
    %p108 = por %p106, %p107
    %p110 = scmp.ne.s32.totalorder %s93, %s109
    %p111 = scmp.eq.s32.totalorder %s17, 0
    %p112 = por %p110, %p111
    %s113 = ssub.s32 %s18, %s30
    %p114 = scmp.eq.s32.totalorder %s113, 0
    %s116 = sadd.s32 %s115, 1
    %s117 = scalar_select %p114, %s115, %s116
    %p120 = pneg %p114
    %p121 = scmp.eq.s32.totalorder %s11, 1
    %p122 = por %p120, %p121
    %p123 = scmp.ne.s32.totalorder %s115, %s118
    %p124 = scmp.eq.s32.totalorder %s11, 0
    %p125 = por %p123, %p124
    %p126 = scmp.ne.s32.totalorder %s115, %s118
    %p127 = scmp.eq.s32.totalorder %s16, 1
    %p128 = por %p126, %p127
    %p129 = scmp.ne.s32.totalorder %s118, %s119
    %p130 = scmp.eq.s32.totalorder %s16, 0
    %p131 = por %p129, %p130
    %p132 = scmp.ne.s32.totalorder %s118, %s119
    %p133 = scmp.eq.s32.totalorder %s17, 1
    %p134 = por %p132, %p133
    %p136 = scmp.ne.s32.totalorder %s119, %s135
    %p137 = scmp.eq.s32.totalorder %s17, 0
    %p138 = por %p136, %p137
    %s139 = ssub.s32 %s18, %s30
    %p140 = scmp.eq.s32.totalorder %s139, 0
    %s142 = sadd.s32 %s141, 1
    %s143 = scalar_select %p140, %s141, %s142
    %p146 = pneg %p140
    %p147 = scmp.eq.s32.totalorder %s11, 1
    %p148 = por %p146, %p147
    %p149 = scmp.ne.s32.totalorder %s141, %s144
    %p150 = scmp.eq.s32.totalorder %s11, 0
    %p151 = por %p149, %p150
    %p152 = scmp.ne.s32.totalorder %s141, %s144
    %p153 = scmp.eq.s32.totalorder %s16, 1
    %p154 = por %p152, %p153
    %p155 = scmp.ne.s32.totalorder %s144, %s145
    %p156 = scmp.eq.s32.totalorder %s16, 0
    %p157 = por %p155, %p156
    %p158 = scmp.ne.s32.totalorder %s144, %s145
    %p159 = scmp.eq.s32.totalorder %s17, 1
    %p160 = por %p158, %p159
    %p162 = scmp.ne.s32.totalorder %s145, %s161
    %p163 = scmp.eq.s32.totalorder %s17, 0
    %p164 = por %p162, %p163
    %p165 = scmp.le.s32.totalorder 1, %s11
    %p166 = scmp.lt.s32.totalorder %s11, 3
    %p167 = pnand %p165, %p166
    %p168 = pneg %p167
    // Predicated region
    $region9: #{dice_loss_multiclass.1} parent=5 // pred_check
      _
    $region10: #{dice_loss_multiclass.1} parent=5 // pred_check_branch
      %170 = sbr.rel (%p167) target = $region12
    $region11: #{dice_loss_multiclass.1} parent=5 // pred_region
      %s171 = ssub.s32 %s11, 1
    $region12: #{dice_loss_multiclass.1} parent=5 // pred_fallthru
      _
    %p172 = scmp.lt.s32.totalorder %s11, 2
    // Predicated region
    $region13: #{dice_loss_multiclass.1} parent=5 // pred_check
      %p173 = pneg %p172
    $region14: #{dice_loss_multiclass.1} parent=5 // pred_check_branch
      %175 = sbr.rel (%p173) target = $region16
    $region15: #{dice_loss_multiclass.1} parent=5 // pred_region
      // Predicated region
      $region17: #{dice_loss_multiclass.1} parent=15 // pred_check
        %p176 = pneg %p45
      $region18: #{dice_loss_multiclass.1} parent=15 // pred_check_branch
        %178 = sbr.rel (%p176) target = $region20
      $region19: #{dice_loss_multiclass.1} parent=15 // pred_region
        %s179 = smul.u32 2, %s19
        %p180 = scmp.lt.s32.totalorder %s18, 1
        %s181 = scalar_select %p180, %s18, 1
        %p182 = scmp.lt.s32.totalorder %s179, 1
        %s183 = scalar_select %p182, %s179, 1
        %s184 = smul.addr %s181, 2
        %s185 = sadd.s32 %s183, %s184
        %s186 = smul.addr %s185, 4
        %s187 = scalar_lea.vmem %s0, %s186
        %s188 = smul.u32 2, %s19
      $region20: #{dice_loss_multiclass.1} parent=15 // pred_fallthru
        _
      // Predicated region
      $region21: #{dice_loss_multiclass.1} parent=15 // pred_check
        %p189 = pneg %p73
      $region22: #{dice_loss_multiclass.1} parent=15 // pred_check_branch
        %191 = sbr.rel (%p189) target = $region24
      $region23: #{dice_loss_multiclass.1} parent=15 // pred_region
        %s192 = smul.u32 2, %s19
        %p193 = scmp.lt.s32.totalorder %s18, 1
        %s194 = scalar_select %p193, %s18, 1
        %p195 = scmp.lt.s32.totalorder %s192, 1
        %s196 = scalar_select %p195, %s192, 1
        %s197 = smul.addr %s194, 2
        %s198 = sadd.s32 %s196, %s197
        %s199 = scalar_lea.vmem %s1, %s198
        %s200 = smul.u32 2, %s19
      $region24: #{dice_loss_multiclass.1} parent=15 // pred_fallthru
        _
    $region16: #{dice_loss_multiclass.1} parent=5 // pred_fallthru
      _
    %p201 = scmp.le.s32.totalorder 1, %s11
    %p202 = scmp.lt.s32.totalorder %s11, 3
    %p203 = pnand %p201, %p202
    %p204 = pneg %p203
    // Predicated region
    $region25: #{dice_loss_multiclass.1} parent=5 // pred_check
      _
    $region26: #{dice_loss_multiclass.1} parent=5 // pred_check_branch
      %206 = sbr.rel (%p203) target = $region28
    $region27: #{dice_loss_multiclass.1} parent=5 // pred_region
      %s207 = ssub.s32 %s11, 1
      %s208 = smul.u32 2, %s21
      %p209 = scmp.lt.s32.totalorder %s20, 1
      %s210 = scalar_select %p209, %s20, 1
      %p211 = scmp.lt.s32.totalorder %s208, 1
      %s212 = scalar_select %p211, %s208, 1
      %s213 = smul.addr %s210, 2
      %s214 = sadd.s32 %s212, %s213
      %s215 = smul.addr %s214, 4
      %s216 = scalar_lea.vmem %s0, %s215
      %p217 = pneg %p51
      %p218 = pneg %p48
      %s219 = smul.u32 2, %s21
      %p220 = scmp.lt.s32.totalorder %s20, 1
      %s221 = scalar_select %p220, %s20, 1
      %p222 = scmp.lt.s32.totalorder %s219, 1
      %s223 = scalar_select %p222, %s219, 1
      %s224 = smul.addr %s221, 2
      %s225 = sadd.s32 %s223, %s224
      %s226 = scalar_lea.vmem %s1, %s225
      %p227 = pneg %p79
      %p228 = pneg %p76
      %p229 = pneg %p105
      %p230 = pneg %p102
      %p231 = scmp.lt.s32.totalorder %s20, 1
      %s232 = scalar_select %p231, %s20, 1
      %s233 = smul.addr %s232, 4
      %s234 = scalar_lea.vmem %s2, %s233
      %p235 = pneg %p131
      %p236 = pneg %p128
      %p237 = scmp.lt.s32.totalorder %s20, 1
      %s238 = scalar_select %p237, %s20, 1
      %s239 = smul.addr %s238, 4
      %s240 = scalar_lea.vmem %s3, %s239
      %p241 = pneg %p157
      %p242 = pneg %p154
      %p243 = scmp.lt.s32.totalorder %s20, 1
      %s244 = scalar_select %p243, %s20, 1
      %s245 = smul.addr %s244, 4
      %s246 = scalar_lea.vmem %s4, %s245
      %s247 = smul.u32 2, %s21
      %p248 = scmp.lt.s32.totalorder %s20, 1
      %s249 = scalar_select %p248, %s20, 1
      %p250 = scmp.lt.s32.totalorder %s247, 1
      %s251 = scalar_select %p250, %s247, 1
      %s252 = smul.addr %s249, 2
      %s253 = sadd.s32 %s251, %s252
      %s254 = smul.addr %s253, 4
      %s255 = scalar_lea.vmem %s0, %s254
      %s256 = smul.u32 2, %s21
      %s257 = smul.u32 2, %s21
      %p258 = scmp.lt.s32.totalorder %s20, 1
      %s259 = scalar_select %p258, %s20, 1
      %p260 = scmp.lt.s32.totalorder %s257, 1
      %s261 = scalar_select %p260, %s257, 1
      %s262 = smul.addr %s259, 2
      %s263 = sadd.s32 %s261, %s262
      %s264 = scalar_lea.vmem %s1, %s263
      %s265 = smul.u32 2, %s21
      %p266 = scmp.lt.s32.totalorder %s20, 1
      %s267 = scalar_select %p266, %s20, 1
      %s268 = smul.addr %s267, 4
      %s269 = scalar_lea.vmem %s2, %s268
      %p270 = scmp.lt.s32.totalorder %s20, 1
      %s271 = scalar_select %p270, %s20, 1
      %s272 = smul.addr %s271, 4
      %s273 = scalar_lea.vmem %s3, %s272
      %p274 = scmp.lt.s32.totalorder %s20, 1
      %s275 = scalar_select %p274, %s20, 1
      %s276 = smul.addr %s275, 4
      %s277 = scalar_lea.vmem %s4, %s276
      %p278 = scmp.eq.s32.totalorder %s21, 0
      // Predicated region
      $region29: #{dice_loss_multiclass.1} parent=27 // pred_check
        %p279 = pneg %p278
      $region30: #{dice_loss_multiclass.1} parent=27 // pred_check_branch
        %281 = sbr.rel (%p279) target = $region32
      $region31: #{dice_loss_multiclass.1} parent=27 // pred_region
        %vm282 = vcmask 3072
        %283 = vst.msk [vmem:[#allocation2] sm:$0xf] %vm282, 0.0
        %284 = vst.msk [vmem:[#allocation3] sm:$0xf] %vm282, 0.0
        %285 = vst.msk [vmem:[#allocation4] sm:$0xf] %vm282, 0.0
      $region32: #{dice_loss_multiclass.1} parent=27 // pred_fallthru
        _
      %v286 = vld [vmem:[%s255] sm:$0xff]
      %v288 = vcombine.high %v286, %v286
      %vm290 = vcmask 1043456
      %v291 = vsel %vm290, %v286, -inf
      %v292 = vrot.slane %v291, 4
      %v293 = vmax.f32 %v291, %v292
      %v294 = vrot.slane %v293, 2
      %v295 = vmax.f32 %v293, %v294
      %v296 = vrot.slane %v295, 1
      %v297 = vmax.f32 %v295, %v296
      %v298 = vsel %vm290, %v288, -inf
      %v299 = vrot.slane %v298, 4
      %v300 = vmax.f32 %v298, %v299
      %v301 = vrot.slane %v300, 2
      %v302 = vmax.f32 %v300, %v301
      %v303 = vrot.slane %v302, 1
      %v304 = vmax.f32 %v302, %v303
      %v307 = vcombine.low %v297, %v304
      %v309 = vsub.f32 %v286, %v307
      %v310 = vmul.f32 %v309, 1.442695
      %v311 = vpow.pop %v310
      %v313 = vcombine.high %v311, %v311
      %v315 = vsel %vm290, %v311, 0.0
      %v316 = vrot.slane %v315, 4
      %v317 = vadd.f32 %v315, %v316
      %v318 = vrot.slane %v317, 2
      %v319 = vadd.f32 %v317, %v318
      %v320 = vrot.slane %v319, 1
      %v321 = vadd.f32 %v319, %v320
      %v322 = vsel %vm290, %v313, 0.0
      %v323 = vrot.slane %v322, 4
      %v324 = vadd.f32 %v322, %v323
      %v325 = vrot.slane %v324, 2
      %v326 = vadd.f32 %v324, %v325
      %v327 = vrot.slane %v326, 1
      %v328 = vadd.f32 %v326, %v327
      %v329 = vrcp.pop %v321
      %v330 = vrcp.pop %v328
      %v333 = vcombine.low %v329, %v330
      %v335 = vmul.f32 %v311, %v333
      %v336 = vld [vmem:[%s264] sm:$0x3]
      %v337 = vlaneseq
      %v338 = vshrl.u32 %v337, 7
      %v339 = vlaneseq
      %v340 = vshrl.u32 %v339, 7
      %v341 = vsub.s32 0, %v340
      %v342 = vrot.slane %v336, %v341
      %v343 = vlaneseq
      %v344 = vshrl.u32 %v343, 7
      %v345 = vsub.s32 1, %v344
      %v346 = vrot.slane %v336, %v345
      %vm347 = vcmp.eq.s32.totalorder %v342, %v338
      %vm348 = vcmp.eq.s32.totalorder %v346, %v338
      %v349 = vld [vmem:[#allocation2] sm:$0xf]
      %v351 = vcombine.high %v335, %v335
      %v353 = vsel %vm347, %v335, 0.0
      %v354 = vsel %vm348, %v351, 0.0
      %v355 = vsel %vm290, %v353, 0.0
      %v356 = vsel %vm290, %v354, 0.0
      %v357 = vadd.f32 %v355, %v356
      %358 = vadd.xlane.f32.xlu0 %v357
      %v359 = vpop.xlane.xlu0 %358
      %v360 = vadd.f32 %v349, %v359
      %vm361 = vcmask 3072
      %362 = vst.msk [vmem:[#allocation2] sm:$0xf] %vm361, %v360
      %v363 = vld [vmem:[#allocation3] sm:$0xf]
      %v364 = vsel %vm290, %v335, 0.0
      %v365 = vsel %vm290, %v351, 0.0
      %v366 = vadd.f32 %v364, %v365
      %367 = vadd.xlane.f32.xlu0 %v366
      %v368 = vpop.xlane.xlu0 %367
      %v369 = vadd.f32 %v363, %v368
      %370 = vst.msk [vmem:[#allocation3] sm:$0xf] %vm361, %v369
      %v371 = vld [vmem:[#allocation4] sm:$0xf]
      %v372 = vsel %vm347, 1, 0
      %v373 = vsel %vm348, 1, 0
      %v374 = vcvt.s32.f32 %v372
      %v375 = vcvt.s32.f32 %v373
      %v376 = vsel %vm290, %v374, 0.0
      %v377 = vsel %vm290, %v375, 0.0
      %v378 = vadd.f32 %v376, %v377
      %379 = vadd.xlane.f32.xlu0 %v378
      %v380 = vpop.xlane.xlu0 %379
      %v381 = vadd.f32 %v371, %v380
      %382 = vst.msk [vmem:[#allocation4] sm:$0xf] %vm361, %v381
      // Predicated region
      $region33: #{dice_loss_multiclass.1} parent=27 // pred_check
        %p383 = pneg %p278
      $region34: #{dice_loss_multiclass.1} parent=27 // pred_check_branch
        %385 = sbr.rel (%p383) target = $region36
      $region35: #{dice_loss_multiclass.1} parent=27 // pred_region
        %v386 = vld [vmem:[#allocation2] sm:$0xf]
        %387 = vst.msk [vmem:[%s269] sm:$0xf] %vm361, %v386
        %v388 = vld [vmem:[#allocation3] sm:$0xf]
        %389 = vst.msk [vmem:[%s273] sm:$0xf] %vm361, %v388
        %v390 = vld [vmem:[#allocation4] sm:$0xf]
        %391 = vst.msk [vmem:[%s277] sm:$0xf] %vm361, %v390
      $region36: #{dice_loss_multiclass.1} parent=27 // pred_fallthru
        _
      %p392 = scmp.lt.s32.totalorder %s20, 1
      %s393 = scalar_select %p392, %s20, 1
      %s394 = smul.addr %s393, 4
      %s395 = scalar_lea.vmem %s2, %s394
      %p396 = scmp.lt.s32.totalorder %s20, 1
      %s397 = scalar_select %p396, %s20, 1
      %s398 = smul.addr %s397, 4
      %s399 = scalar_lea.vmem %s3, %s398
      %p400 = scmp.lt.s32.totalorder %s20, 1
      %s401 = scalar_select %p400, %s20, 1
      %s402 = smul.addr %s401, 4
      %s403 = scalar_lea.vmem %s4, %s402
      // Predicated region
      $region37: #{dice_loss_multiclass.1} parent=27 // pred_check
        %p404 = pneg %p102
      $region38: #{dice_loss_multiclass.1} parent=27 // pred_check_branch
        %406 = sbr.rel (%p404) target = $region40
      $region39: #{dice_loss_multiclass.1} parent=27 // pred_region
        _
      $region40: #{dice_loss_multiclass.1} parent=27 // pred_fallthru
        _
      // Predicated region
      $region41: #{dice_loss_multiclass.1} parent=27 // pred_check
        %p407 = pneg %p128
      $region42: #{dice_loss_multiclass.1} parent=27 // pred_check_branch
        %409 = sbr.rel (%p407) target = $region44
      $region43: #{dice_loss_multiclass.1} parent=27 // pred_region
        _
      $region44: #{dice_loss_multiclass.1} parent=27 // pred_fallthru
        _
      // Predicated region
      $region45: #{dice_loss_multiclass.1} parent=27 // pred_check
        %p410 = pneg %p154
      $region46: #{dice_loss_multiclass.1} parent=27 // pred_check_branch
        %412 = sbr.rel (%p410) target = $region48
      $region47: #{dice_loss_multiclass.1} parent=27 // pred_region
        _
      $region48: #{dice_loss_multiclass.1} parent=27 // pred_fallthru
        _
    $region28: #{dice_loss_multiclass.1} parent=5 // pred_fallthru
      _
    %p413 = scmp.le.s32.totalorder 2, %s11
    // Predicated region
    $region49: #{dice_loss_multiclass.1} parent=5 // pred_check
      %p414 = pneg %p413
    $region50: #{dice_loss_multiclass.1} parent=5 // pred_check_branch
      %416 = sbr.rel (%p414) target = $region52
    $region51: #{dice_loss_multiclass.1} parent=5 // pred_region
      %s417 = ssub.s32 %s11, 2
      // Predicated region
      $region53: #{dice_loss_multiclass.1} parent=51 // pred_check
        %p418 = pneg %p108
      $region54: #{dice_loss_multiclass.1} parent=51 // pred_check_branch
        %420 = sbr.rel (%p418) target = $region56
      $region55: #{dice_loss_multiclass.1} parent=51 // pred_region
        %p421 = scmp.lt.s32.totalorder %s22, 1
        %s422 = scalar_select %p421, %s22, 1
        %s423 = smul.addr %s422, 4
        %s424 = scalar_lea.vmem %s2, %s423
      $region56: #{dice_loss_multiclass.1} parent=51 // pred_fallthru
        _
      // Predicated region
      $region57: #{dice_loss_multiclass.1} parent=51 // pred_check
        %p425 = pneg %p134
      $region58: #{dice_loss_multiclass.1} parent=51 // pred_check_branch
        %427 = sbr.rel (%p425) target = $region60
      $region59: #{dice_loss_multiclass.1} parent=51 // pred_region
        %p428 = scmp.lt.s32.totalorder %s22, 1
        %s429 = scalar_select %p428, %s22, 1
        %s430 = smul.addr %s429, 4
        %s431 = scalar_lea.vmem %s3, %s430
      $region60: #{dice_loss_multiclass.1} parent=51 // pred_fallthru
        _
      // Predicated region
      $region61: #{dice_loss_multiclass.1} parent=51 // pred_check
        %p432 = pneg %p160
      $region62: #{dice_loss_multiclass.1} parent=51 // pred_check_branch
        %434 = sbr.rel (%p432) target = $region64
      $region63: #{dice_loss_multiclass.1} parent=51 // pred_region
        %p435 = scmp.lt.s32.totalorder %s22, 1
        %s436 = scalar_select %p435, %s22, 1
        %s437 = smul.addr %s436, 4
        %s438 = scalar_lea.vmem %s4, %s437
      $region64: #{dice_loss_multiclass.1} parent=51 // pred_fallthru
        _
    $region52: #{dice_loss_multiclass.1} parent=5 // pred_fallthru
      _
  $region6: #{dice_loss_multiclass.1} parent=0 // loop_footer
    %s15 = sadd.s32 1, %s11
  $region7: #{dice_loss_multiclass.1} parent=0 // loop_footer_branch
    %10 = sbr.rel target = $region3
  $region8: #{dice_loss_multiclass.1} parent=0 // loop_exit
    _

</llo_original>
